<compile_context>
chip_gen: v5e
topology: v5e:2x2
jax: 0.10.0
libtpu: 0.0.40
codegen_flags: <defaults>
</compile_context>

<pallas_src>
import jax
import jax.numpy as jnp
from jax.experimental import pallas as pl
from jax.experimental.pallas import tpu as pltpu

_LANES = 128


def _mish_kernel(x_ref, o_ref):
    x = x_ref[...].astype(jnp.float32)
    # tanh(softplus(x)) == t*(t+2) / (t*(t+2) + 2) with t = e^x.
    # Clamp the exponent argument at 20: for x >= 20 the ratio is exactly 1.0f,
    # so the output is x and the exp never overflows.
    xc = jnp.minimum(x, 20.0)
    t = jnp.exp(xc)
    num = t * (t + 2.0)
    den = num + 2.0
    # Exact f32 divide (memory-bound kernel -> the divide is hidden under DMA).
    o_ref[...] = (x * (num / den)).astype(o_ref.dtype)


def _mish_jnp(x):
    """Fused pure-JAX Mish (stable softplus) — used only for sub-row tails."""
    xf = x.astype(jnp.float32)
    sp = jnp.maximum(xf, 0.0) + jnp.log1p(jnp.exp(-jnp.abs(xf)))
    return (xf * jnp.tanh(sp)).astype(x.dtype)


def mish(x: jax.Array, *, target_block_bytes: int = 4 << 20) -> jax.Array:
    """Elementwise Mish over an arbitrarily shaped array via a Pallas kernel.

    The flattened tensor is viewed as a lane-dense (rows, 128) slab and
    streamed through ~`target_block_bytes` blocks.  Any trailing < 128-element
    remainder is computed with a tiny fused jnp expression (no full-array
    pad/slice HBM passes).
    """
    orig_shape = x.shape
    dtype = x.dtype
    n = x.size
    if n == 0:
        return x

    flat = x.reshape(-1)
    n_main = (n // _LANES) * _LANES
    if n_main == 0:
        # Fewer than 128 elements: not worth a kernel launch.
        return _mish_jnp(flat).reshape(orig_shape)

    rows = n_main // _LANES
    x2d = (flat if n_main == n else flat[:n_main]).reshape(rows, _LANES)

    itemsize = jnp.dtype(dtype).itemsize
    # Native packed sublane granularity: 8 (32-bit), 16 (bf16), 32 (int8/fp8).
    sub = max(8, 32 // itemsize)
    # Rows per block targeting ~target_block_bytes, rounded to the sublane
    # granularity; single full-array block for small inputs.
    tile_rows = max(sub, (target_block_bytes // (_LANES * itemsize)) // sub * sub)
    tile_rows = min(tile_rows, rows)
    grid = pl.cdiv(rows, tile_rows)  # ragged last block is masked by Pallas

    block_bytes = tile_rows * _LANES * itemsize
    # Double-buffered in + out = 4 * block_bytes; add headroom for internal
    # scratch.  Capped well below v7x's 64 MiB-per-TC physical VMEM.
    vmem_limit = min(4 * block_bytes + (8 << 20), 48 << 20)

    out2d = pl.pallas_call(
        _mish_kernel,
        out_shape=jax.ShapeDtypeStruct((rows, _LANES), dtype),
        grid_spec=pltpu.PrefetchScalarGridSpec(
            num_scalar_prefetch=0,
            grid=(grid,),
            in_specs=[pl.BlockSpec((tile_rows, _LANES), lambda i: (i, 0))],
            out_specs=pl.BlockSpec((tile_rows, _LANES), lambda i: (i, 0)),
        ),
        compiler_params=pltpu.CompilerParams(
            dimension_semantics=("parallel",),   # megacore sharding on v7x
            vmem_limit_bytes=vmem_limit,
        ),
        cost_estimate=pl.CostEstimate(
            flops=8 * n_main,
            transcendentals=2 * n_main,
            bytes_accessed=2 * n_main * itemsize,
        ),
    )(x2d)

    if n_main == n:
        return out2d.reshape(orig_shape)
    tail = _mish_jnp(flat[n_main:])              # < 128 elements, negligible
    return jnp.concatenate([out2d.reshape(-1), tail]).reshape(orig_shape)


def _mish_ref(x):
    """Pure-JAX reference: x * tanh(softplus(x)) with the stable softplus."""
    xf = x.astype(jnp.float32)
    sp = jnp.maximum(xf, 0.0) + jnp.log1p(jnp.exp(-jnp.abs(xf)))
    return (xf * jnp.tanh(sp)).astype(x.dtype)


if __name__ == "__main__":
    key = jax.random.PRNGKey(0)

    # 1) NCHW input, consistent with conv-net activation usage (basic_ch=4).
    x = jax.random.normal(key, (2, 4, 16, 16), dtype=jnp.float32)
    ref = _mish_ref(x)
    out = mish(x)
    jax.block_until_ready(out)
    assert out.shape == x.shape
    assert jnp.allclose(out, ref, atol=1e-5, rtol=1e-5)

    # 2) Size not a multiple of 128 (exercises the prefix+tail path) and
    #    extreme values (exercises the overflow-safe single-exp formulation).
    x2 = jax.random.normal(jax.random.PRNGKey(1), (3, 5, 17, 19),
                           dtype=jnp.float32) * 30.0
    ref2 = _mish_ref(x2)
    out2 = mish(x2)
    jax.block_until_ready(out2)
    assert out2.shape == x2.shape
    assert jnp.allclose(out2, ref2, atol=1e-5, rtol=1e-5)

    # 3) Multi-block grid with a ragged last block (small forced block size).
    x3 = jax.random.normal(jax.random.PRNGKey(2), (2, 4, 16, 20),
                           dtype=jnp.float32)        # 2560 elems -> 20 rows
    ref3 = _mish_ref(x3)
    out3 = mish(x3, target_block_bytes=8 * _LANES * 4)   # 8-row blocks, grid=3
    jax.block_until_ready(out3)
    assert out3.shape == x3.shape
    assert jnp.allclose(out3, ref3, atol=1e-5, rtol=1e-5)

    # 4) bf16 I/O path (dtype-aware tiling; math still f32 inside the kernel).
    x4 = jax.random.normal(jax.random.PRNGKey(3), (2, 4, 16, 16),
                           dtype=jnp.bfloat16)
    ref4 = _mish_ref(x4)
    out4 = mish(x4)
    jax.block_until_ready(out4)
    assert out4.dtype == jnp.bfloat16 and out4.shape == x4.shape
    assert jnp.allclose(out4.astype(jnp.float32), ref4.astype(jnp.float32),
                        atol=2e-2, rtol=2e-2)

    print("KERNEL_OK")
</pallas_src>

<mosaic_0001>
module attributes {stable_mosaic.version = 11 : i64} {
  func.func @_mish_kernel(%arg0: i32, %arg1: memref<16x128xf32, #tpu.memory_space<vmem>>, %arg2: memref<16x128xf32, #tpu.memory_space<vmem>>) attributes {dimension_semantics = [#tpu.dimension_semantics<parallel>], iteration_bounds = array<i64: 1>, scalar_prefetch = 0 : i64, scratch_operands = 0 : i64, tpu.core_type = #tpu.core_type<tc>, window_params = [{transform_indices = @transform_0, window_bounds = array<i64: 16, 128>}, {transform_indices = @transform_1, window_bounds = array<i64: 16, 128>}]} {
    %c0 = arith.constant 0 : index
    %c0_0 = arith.constant 0 : index
    %0 = vector.load %arg1[%c0, %c0_0] : memref<16x128xf32, #tpu.memory_space<vmem>>, vector<16x128xf32>
    %cst = arith.constant 2.000000e+01 : f32
    %1 = vector.broadcast %cst : f32 to vector<16x128xf32>
    %2 = arith.minimumf %0, %1 : vector<16x128xf32>
    %3 = math.exp %2 : vector<16x128xf32>
    %cst_1 = arith.constant 2.000000e+00 : f32
    %4 = vector.broadcast %cst_1 : f32 to vector<16x128xf32>
    %5 = arith.addf %3, %4 : vector<16x128xf32>
    %6 = arith.mulf %3, %5 : vector<16x128xf32>
    %cst_2 = arith.constant 2.000000e+00 : f32
    %7 = vector.broadcast %cst_2 : f32 to vector<16x128xf32>
    %8 = arith.addf %6, %7 : vector<16x128xf32>
    %9 = arith.divf %6, %8 : vector<16x128xf32>
    %10 = arith.mulf %0, %9 : vector<16x128xf32>
    %c0_3 = arith.constant 0 : index
    %c0_4 = arith.constant 0 : index
    %11 = vector.load %arg2[%c0_3, %c0_4] : memref<16x128xf32, #tpu.memory_space<vmem>>, vector<16x128xf32>
    tpu.vector_store %arg2[%c0_3, %c0_4], %10 {strides = array<i32>} : memref<16x128xf32, #tpu.memory_space<vmem>>, vector<16x128xf32>,
    return
  }
  func.func @transform_0(%arg0: i32) -> (i32, i32) {
    %c0_i32 = arith.constant 0 : i32
    %c0_i32_0 = arith.constant 0 : i32
    return %arg0, %c0_i32 : i32, i32
  }
  func.func @transform_1(%arg0: i32) -> (i32, i32) {
    %c0_i32 = arith.constant 0 : i32
    %c0_i32_0 = arith.constant 0 : i32
    return %arg0, %c0_i32 : i32, i32
  }
}

</mosaic_0001>

<llo_original>
// kernel: tpu_custom_call.1
$region0: #{tpu_custom_call.1}
  #allocation0 [shape = 'u32[]', space=smem, size = 0x4, offset = 0x4, fixed_abs, tag = 'smem constant byte address 0x4 - core index']
  #allocation1 [shape = 'u32[72,128]{1,0:T(1,128)}', space=vmem, size = 0x9000, scoped, tag = 'internal scratch']
  %s0 = inlined_call_operand.hbm [shape: f32[16,128], index: 0, kind: input, shape index: {}]
  %s1 = inlined_call_operand.hbm [shape: f32[16,128], index: 1, kind: output, shape index: {}]
  %s2 = sld [smem:[#allocation0]]
  $region18: #{tpu_custom_call.1} parent=0
    _
  %s4 = ssub.s32 1, %s2
  %s5 = scalar_select 0, %s4, %s2
  $region1: #{tpu_custom_call.1} parent=0
    #allocation2 [shape = 'u8[8192]{0}', space=vmem, size = 0x2000, scoped, tag = 'input window, operand 0, single buffered']
    #allocation3 [shape = 's32[1]{0}', space=sflag, size = 0x4, scoped, tag = 'scoped memory for tpu_custom_call.1']
    #allocation4 [shape = 's32[1]{0}', space=sflag, size = 0x4, scoped, tag = 'scoped memory for tpu_custom_call.1']
    #allocation5 [shape = 'u8[8192]{0}', space=vmem, size = 0x2000, scoped, tag = 'output window, operand 0, single buffered']
    %6 = vsyncpa [#allocation3], 0
    %7 = vsyncpa [#allocation4], 0
    // Predicated region
    $region2: #{tpu_custom_call.1} parent=1 // pred_check
      _
    $region3: #{tpu_custom_call.1} parent=1 // pred_check_branch
      %9 = sbr.rel (0) target = $region5
    $region4: #{tpu_custom_call.1} parent=1 // pred_region
      %11 = vsyncadd [#allocation3], 0
      %s12 = sshll.u32 %s0, 4
      %s13 = int_to_ptr.hbm [resolvable:$true] %s12
      %s14 = sshll.u32 [#allocation2], 4
      %s15 = int_to_ptr.vmem [resolvable:$true] %s14
      %20 = dma.hbm_to_vmem [thread:$0]  %s13, 256, %s15, [#allocation3], 128, 128, 8
    $region5: #{tpu_custom_call.1} parent=1 // pred_fallthru
      _
    // Predicated region
    $region6: #{tpu_custom_call.1} parent=1 // pred_check
      _
    $region7: #{tpu_custom_call.1} parent=1 // pred_check_branch
      %22 = sbr.rel (0) target = $region9
    $region8: #{tpu_custom_call.1} parent=1 // pred_region
      %24 = dma.done [#allocation3], 256
    $region9: #{tpu_custom_call.1} parent=1 // pred_fallthru
      _
    %v25 = vld [vmem:[#allocation2] sm:$0xff]
    %v26 = vld [vmem:[#allocation2 + $0x8] sm:$0xff]
    %v27 = vmin.f32 %v25, 20.0
    %v28 = vmin.f32 %v26, 20.0
    %v29 = vmul.f32 %v27, 1.442695
    %v30 = vpow.pop %v29
    %v31 = vmul.f32 %v28, 1.442695
    %v32 = vpow.pop %v31
    %v33 = vadd.f32 %v30, 2.0
    %v34 = vadd.f32 %v32, 2.0
    %v35 = vmul.f32 %v30, %v33
    %v36 = vmul.f32 %v32, %v34
    %v37 = vadd.f32 %v35, 2.0
    %v38 = vadd.f32 %v36, 2.0
    %v39 = vrcp.pop %v37
    %v40 = vmul.f32 %v37, %v39
    %v41 = vsub.f32 1.0, %v40
    %v42 = vmul.f32 %v39, %v41
    %v43 = vadd.f32 %v39, %v42
    %vm44 = vweird.f32 %v37
    %vm45 = vweird.f32 %v39
    %vm46 = vmor %vm44, %vm45
    %v47 = vsel %vm46, %v39, %v43
    %v48 = vand.u32 2147483647, %v37
    %vm49 = vcmp.eq.f32.partialorder %v48, 8.507059e+37
    %v50 = vand.u32 %v37, 2147483648
    %v51 = vor.u32 1.1754944e-38, %v50
    %v52 = vsel %vm49, %v51, %v47
    %v53 = vmul.f32 %v35, %v52
    %v54 = vrcp.pop %v38
    %v55 = vmul.f32 %v38, %v54
    %v56 = vsub.f32 1.0, %v55
    %v57 = vmul.f32 %v54, %v56
    %v58 = vadd.f32 %v54, %v57
    %vm59 = vweird.f32 %v38
    %vm60 = vweird.f32 %v54
    %vm61 = vmor %vm59, %vm60
    %v62 = vsel %vm61, %v54, %v58
    %v63 = vand.u32 2147483647, %v38
    %vm64 = vcmp.eq.f32.partialorder %v63, 8.507059e+37
    %v65 = vand.u32 %v38, 2147483648
    %v66 = vor.u32 1.1754944e-38, %v65
    %v67 = vsel %vm64, %v66, %v62
    %v68 = vmul.f32 %v36, %v67
    %v69 = vmul.f32 %v25, %v53
    %v70 = vmul.f32 %v26, %v68
    %71 = vst [vmem:[#allocation5] sm:$0xff] %v69
    %72 = vst [vmem:[#allocation5 + $0x8] sm:$0xff] %v70
    // Predicated region
    $region10: #{tpu_custom_call.1} parent=1 // pred_check
      _
    $region11: #{tpu_custom_call.1} parent=1 // pred_check_branch
      %74 = sbr.rel (0) target = $region13
    $region12: #{tpu_custom_call.1} parent=1 // pred_region
      %76 = vsyncadd [#allocation4], 0
      %s77 = sshll.u32 [#allocation5], 4
      %s78 = int_to_ptr.vmem [resolvable:$true] %s77
      %s79 = sshll.u32 %s1, 4
      %s80 = int_to_ptr.hbm [resolvable:$true] %s79
      %85 = dma.vmem_to_hbm [thread:$0]  %s78, 256, %s80, [#allocation4], 128, 128, 8
    $region13: #{tpu_custom_call.1} parent=1 // pred_fallthru
      _
    // Predicated region
    $region14: #{tpu_custom_call.1} parent=1 // pred_check
      _
    $region15: #{tpu_custom_call.1} parent=1 // pred_check_branch
      %87 = sbr.rel (0) target = $region17
    $region16: #{tpu_custom_call.1} parent=1 // pred_region
      %89 = dma.done [#allocation4], 256
    $region17: #{tpu_custom_call.1} parent=1 // pred_fallthru
      _
    %90 = vsyncpa [#allocation3], 1
    %91 = vsyncpa [#allocation4], 1

</llo_original>
